<compile_context>
chip_gen: v6e
topology: v6e:2x2x1
jax: 0.10.0
libtpu: 0.0.40
codegen_flags: <defaults>
</compile_context>

<pallas_src>
import jax
import jax.numpy as jnp
from jax.experimental import pallas as pl
from jax.experimental.pallas import tpu as pltpu

IN_DIM = 28 * 28                      # 784
H1, H2, H3, OUT = 50, 100, 50, 10     # true layer widths
H1P = H2P = H3P = OUTP = 128          # lane-padded widths (multiples of 128)
TB_MAX = 2048                         # batch tile cap (fits 32MiB VMEM budget)


def mlp_kernel(x_ref,
               w1_ref, b1_ref,
               w2_ref, b2_ref,
               w3_ref, b3_ref,
               w4_ref, b4_ref,
               out_ref):
    # x tile: (TB, 784) native dtype; weights bf16; biases f32 (1, 128);
    # out (TB, 128) bf16.
    def sigmoid_f32(h):
        # tanh runs on the (otherwise idle) EUP slot instead of a VALU divide.
        return 0.5 * (jnp.tanh(0.5 * h) + 1.0)

    # Cast the freshly-DMA'd tile in VMEM: avoids a wrapper-side XLA pass
    # (f32 read + bf16 write + bf16 re-read) over the dominant HBM stream.
    x = x_ref[...].astype(jnp.bfloat16)

    h = jnp.dot(x, w1_ref[...], preferred_element_type=jnp.float32) + b1_ref[...]
    h = sigmoid_f32(h).astype(jnp.bfloat16)                                # (TB, 128)

    h = jnp.dot(h, w2_ref[...], preferred_element_type=jnp.float32) + b2_ref[...]
    h = sigmoid_f32(h).astype(jnp.bfloat16)                                # (TB, 128)

    h = jnp.dot(h, w3_ref[...], preferred_element_type=jnp.float32) + b3_ref[...]
    h = sigmoid_f32(h).astype(jnp.bfloat16)                                # (TB, 128)

    logits = jnp.dot(h, w4_ref[...], preferred_element_type=jnp.float32) + b4_ref[...]
    out_ref[...] = logits.astype(out_ref.dtype)                            # bf16 lane-dense store


def _pad2(a, rows, cols):
    r, c = a.shape
    return jnp.pad(a, ((0, rows - r), (0, cols - c)))


def prepare_params(params):
    """One-time weight prep (hoisted out of the per-call forward):
    lane-pad weights to 128-wide slabs (zero rows/cols => the padded
    sigmoid(0)=0.5 columns hit zero weight rows downstream, contributing
    nothing) and cast to bf16. Biases stay f32."""
    (w1, b1), (w2, b2), (w3, b3), (w4, b4) = params
    return (
        _pad2(w1, IN_DIM, H1P).astype(jnp.bfloat16),
        _pad2(b1.reshape(1, -1), 1, H1P).astype(jnp.float32),
        _pad2(w2, H1P, H2P).astype(jnp.bfloat16),
        _pad2(b2.reshape(1, -1), 1, H2P).astype(jnp.float32),
        _pad2(w3, H2P, H3P).astype(jnp.bfloat16),
        _pad2(b3.reshape(1, -1), 1, H3P).astype(jnp.float32),
        _pad2(w4, H3P, OUTP).astype(jnp.bfloat16),
        _pad2(b4.reshape(1, -1), 1, OUTP).astype(jnp.float32),
    )


def our_mlp_forward(x, prepared):
    """x: (B, 1, 28, 28) NCHW (f32 or bf16). Returns (B, 10) bf16 logits."""
    B = x.shape[0]
    x_flat = x.reshape(B, IN_DIM)                 # nn.Flatten (free reshape); no dtype cast here

    # Batch tile: multiple of 8 sublanes, capped at TB_MAX, and capped at
    # ~ceil(B/2) so the grid has >=2 steps once B>=16 (v7x megacore split).
    B8 = ((B + 7) // 8) * 8
    half = ((B8 + 15) // 16) * 8                  # ceil(B8/2) rounded up to 8
    TB = min(TB_MAX, max(8, half))
    B_pad = ((B8 + TB - 1) // TB) * TB
    if B_pad != B:
        # Only hit when B isn't already a tile multiple (tiny for small B).
        x_flat = jnp.pad(x_flat, ((0, B_pad - B), (0, 0)))

    grid = (B_pad // TB,)

    weight_elems = IN_DIM * H1P + H1P * H2P + H2P * H3P + H3P * OUTP
    cost = pl.CostEstimate(
        flops=2 * B_pad * weight_elems,
        transcendentals=B_pad * (H1P + H2P + H3P),
        bytes_accessed=(B_pad * IN_DIM * x_flat.dtype.itemsize   # x stream
                        + B_pad * OUTP * 2                        # bf16 output slab
                        + weight_elems * 2
                        + (H1P + H2P + H3P + OUTP) * 4),
    )

    out = pl.pallas_call(
        mlp_kernel,
        out_shape=jax.ShapeDtypeStruct((B_pad, OUTP), jnp.bfloat16),
        grid=grid,
        in_specs=[
            pl.BlockSpec((TB, IN_DIM), lambda i: (i, 0)),     # x: streamed over batch
            pl.BlockSpec((IN_DIM, H1P), lambda i: (0, 0)),    # weights/biases: VMEM resident
            pl.BlockSpec((1, H1P), lambda i: (0, 0)),
            pl.BlockSpec((H1P, H2P), lambda i: (0, 0)),
            pl.BlockSpec((1, H2P), lambda i: (0, 0)),
            pl.BlockSpec((H2P, H3P), lambda i: (0, 0)),
            pl.BlockSpec((1, H3P), lambda i: (0, 0)),
            pl.BlockSpec((H3P, OUTP), lambda i: (0, 0)),
            pl.BlockSpec((1, OUTP), lambda i: (0, 0)),
        ],
        out_specs=pl.BlockSpec((TB, OUTP), lambda i: (i, 0)), # lane-dense bf16 slab
        compiler_params=pltpu.CompilerParams(
            dimension_semantics=("parallel",),
            vmem_limit_bytes=32 * 1024 * 1024),
        cost_estimate=cost,
    )(x_flat, *prepared)

    return out[:B, :OUT]


def init_params(key):
    """PyTorch nn.Linear-style init U(-1/sqrt(fan_in), +); weights stored as (in, out)."""
    dims = [(IN_DIM, H1), (H1, H2), (H2, H3), (H3, OUT)]
    params = []
    for (fan_in, fan_out) in dims:
        key, kw, kb = jax.random.split(key, 3)
        bound = 1.0 / jnp.sqrt(fan_in)
        w = jax.random.uniform(kw, (fan_in, fan_out), jnp.float32, -bound, bound)
        b = jax.random.uniform(kb, (fan_out,), jnp.float32, -bound, bound)
        params.append((w, b))
    return params


if __name__ == "__main__":
    key = jax.random.PRNGKey(0)
    key, kx = jax.random.split(key)

    B = 2
    x = jax.random.normal(kx, (B, 1, 28, 28), jnp.float32)   # MNIST-like NCHW input
    params = init_params(key)
    prepared = prepare_params(params)                        # one-time weight prep

    logits = our_mlp_forward(x, prepared)
    jax.block_until_ready(logits)
    assert logits.shape == (B, OUT)
    logits_f32 = logits.astype(jnp.float32)

    (w1, b1), (w2, b2), (w3, b3), (w4, b4) = params
    xf = x.reshape(B, -1)

    # Reference 1: bf16-consistent math (mirrors the kernel's quantization,
    # including the bf16 hidden activations and bf16 output store).
    def lin(h, w, b):
        return jnp.dot(h.astype(jnp.bfloat16), w.astype(jnp.bfloat16),
                       preferred_element_type=jnp.float32) + b
    r = jax.nn.sigmoid(lin(xf, w1, b1)).astype(jnp.bfloat16)
    r = jax.nn.sigmoid(lin(r, w2, b2)).astype(jnp.bfloat16)
    r = jax.nn.sigmoid(lin(r, w3, b3)).astype(jnp.bfloat16)
    ref_bf16 = lin(r, w4, b4).astype(jnp.bfloat16).astype(jnp.float32)
    assert jnp.allclose(logits_f32, ref_bf16, atol=1e-2, rtol=1e-2)

    # Reference 2: pure f32 (original PyTorch module math) -> loose sanity check.
    r = jax.nn.sigmoid(xf @ w1 + b1)
    r = jax.nn.sigmoid(r @ w2 + b2)
    r = jax.nn.sigmoid(r @ w3 + b3)
    ref_f32 = r @ w4 + b4
    assert jnp.allclose(logits_f32, ref_f32, atol=5e-2, rtol=5e-2)

    print("KERNEL_OK")
</pallas_src>

<mosaic_0001>
module attributes {stable_mosaic.version = 11 : i64} {
  func.func @mlp_kernel(%arg0: i32, %arg1: memref<8x784xf32, #tpu.memory_space<vmem>>, %arg2: memref<784x128xbf16, #tpu.memory_space<vmem>>, %arg3: memref<1x128xf32, #tpu.memory_space<vmem>>, %arg4: memref<128x128xbf16, #tpu.memory_space<vmem>>, %arg5: memref<1x128xf32, #tpu.memory_space<vmem>>, %arg6: memref<128x128xbf16, #tpu.memory_space<vmem>>, %arg7: memref<1x128xf32, #tpu.memory_space<vmem>>, %arg8: memref<128x128xbf16, #tpu.memory_space<vmem>>, %arg9: memref<1x128xf32, #tpu.memory_space<vmem>>, %arg10: memref<8x128xbf16, #tpu.memory_space<vmem>>) attributes {dimension_semantics = [#tpu.dimension_semantics<parallel>], iteration_bounds = array<i64: 1>, scalar_prefetch = 0 : i64, scratch_operands = 0 : i64, tpu.core_type = #tpu.core_type<tc>, window_params = [{transform_indices = @transform_0, window_bounds = array<i64: 8, 784>}, {pipeline_mode = #tpu.pipeline_mode<synchronous>, transform_indices = @transform_1, window_bounds = array<i64: 784, 128>}, {pipeline_mode = #tpu.pipeline_mode<synchronous>, transform_indices = @transform_2, window_bounds = array<i64: 1, 128>}, {pipeline_mode = #tpu.pipeline_mode<synchronous>, transform_indices = @transform_3, window_bounds = array<i64: 128, 128>}, {pipeline_mode = #tpu.pipeline_mode<synchronous>, transform_indices = @transform_4, window_bounds = array<i64: 1, 128>}, {pipeline_mode = #tpu.pipeline_mode<synchronous>, transform_indices = @transform_5, window_bounds = array<i64: 128, 128>}, {pipeline_mode = #tpu.pipeline_mode<synchronous>, transform_indices = @transform_6, window_bounds = array<i64: 1, 128>}, {pipeline_mode = #tpu.pipeline_mode<synchronous>, transform_indices = @transform_7, window_bounds = array<i64: 128, 128>}, {pipeline_mode = #tpu.pipeline_mode<synchronous>, transform_indices = @transform_8, window_bounds = array<i64: 1, 128>}, {transform_indices = @transform_9, window_bounds = array<i64: 8, 128>}]} {
    %c0 = arith.constant 0 : index
    %c0_0 = arith.constant 0 : index
    %0 = vector.load %arg1[%c0, %c0_0] : memref<8x784xf32, #tpu.memory_space<vmem>>, vector<8x784xf32>
    %1 = arith.truncf %0 : vector<8x784xf32> to vector<8x784xbf16>
    %c0_1 = arith.constant 0 : index
    %c0_2 = arith.constant 0 : index
    %2 = vector.load %arg2[%c0_1, %c0_2] : memref<784x128xbf16, #tpu.memory_space<vmem>>, vector<784x128xbf16>
    %cst = arith.constant dense<0.000000e+00> : vector<8x128xf32>
    %3 = tpu.matmul %1, %2, %cst {dimension_numbers = #tpu.dot_dimension_numbers<[1], [0], [0], [1], [0, 0, 1, 1], [], []>} : vector<8x784xbf16>, vector<784x128xbf16>, vector<8x128xf32> -> vector<8x128xf32>
    %c0_3 = arith.constant 0 : index
    %c0_4 = arith.constant 0 : index
    %4 = vector.load %arg3[%c0_3, %c0_4] : memref<1x128xf32, #tpu.memory_space<vmem>>, vector<1x128xf32>
    %5 = vector.broadcast %4 : vector<1x128xf32> to vector<8x128xf32>
    %6 = arith.addf %3, %5 : vector<8x128xf32>
    %cst_5 = arith.constant 5.000000e-01 : f32
    %7 = vector.broadcast %cst_5 : f32 to vector<8x128xf32>
    %8 = arith.mulf %7, %6 : vector<8x128xf32>
    %9 = math.tanh %8 : vector<8x128xf32>
    %cst_6 = arith.constant 1.000000e+00 : f32
    %10 = vector.broadcast %cst_6 : f32 to vector<8x128xf32>
    %11 = arith.addf %9, %10 : vector<8x128xf32>
    %cst_7 = arith.constant 5.000000e-01 : f32
    %12 = vector.broadcast %cst_7 : f32 to vector<8x128xf32>
    %13 = arith.mulf %12, %11 : vector<8x128xf32>
    %14 = arith.truncf %13 : vector<8x128xf32> to vector<8x128xbf16>
    %c0_8 = arith.constant 0 : index
    %c0_9 = arith.constant 0 : index
    %15 = vector.load %arg4[%c0_8, %c0_9] : memref<128x128xbf16, #tpu.memory_space<vmem>>, vector<128x128xbf16>
    %cst_10 = arith.constant dense<0.000000e+00> : vector<8x128xf32>
    %16 = tpu.matmul %14, %15, %cst_10 {dimension_numbers = #tpu.dot_dimension_numbers<[1], [0], [0], [1], [0, 0, 1, 1], [], []>} : vector<8x128xbf16>, vector<128x128xbf16>, vector<8x128xf32> -> vector<8x128xf32>
    %c0_11 = arith.constant 0 : index
    %c0_12 = arith.constant 0 : index
    %17 = vector.load %arg5[%c0_11, %c0_12] : memref<1x128xf32, #tpu.memory_space<vmem>>, vector<1x128xf32>
    %18 = vector.broadcast %17 : vector<1x128xf32> to vector<8x128xf32>
    %19 = arith.addf %16, %18 : vector<8x128xf32>
    %cst_13 = arith.constant 5.000000e-01 : f32
    %20 = vector.broadcast %cst_13 : f32 to vector<8x128xf32>
    %21 = arith.mulf %20, %19 : vector<8x128xf32>
    %22 = math.tanh %21 : vector<8x128xf32>
    %cst_14 = arith.constant 1.000000e+00 : f32
    %23 = vector.broadcast %cst_14 : f32 to vector<8x128xf32>
    %24 = arith.addf %22, %23 : vector<8x128xf32>
    %cst_15 = arith.constant 5.000000e-01 : f32
    %25 = vector.broadcast %cst_15 : f32 to vector<8x128xf32>
    %26 = arith.mulf %25, %24 : vector<8x128xf32>
    %27 = arith.truncf %26 : vector<8x128xf32> to vector<8x128xbf16>
    %c0_16 = arith.constant 0 : index
    %c0_17 = arith.constant 0 : index
    %28 = vector.load %arg6[%c0_16, %c0_17] : memref<128x128xbf16, #tpu.memory_space<vmem>>, vector<128x128xbf16>
    %cst_18 = arith.constant dense<0.000000e+00> : vector<8x128xf32>
    %29 = tpu.matmul %27, %28, %cst_18 {dimension_numbers = #tpu.dot_dimension_numbers<[1], [0], [0], [1], [0, 0, 1, 1], [], []>} : vector<8x128xbf16>, vector<128x128xbf16>, vector<8x128xf32> -> vector<8x128xf32>
    %c0_19 = arith.constant 0 : index
    %c0_20 = arith.constant 0 : index
    %30 = vector.load %arg7[%c0_19, %c0_20] : memref<1x128xf32, #tpu.memory_space<vmem>>, vector<1x128xf32>
    %31 = vector.broadcast %30 : vector<1x128xf32> to vector<8x128xf32>
    %32 = arith.addf %29, %31 : vector<8x128xf32>
    %cst_21 = arith.constant 5.000000e-01 : f32
    %33 = vector.broadcast %cst_21 : f32 to vector<8x128xf32>
    %34 = arith.mulf %33, %32 : vector<8x128xf32>
    %35 = math.tanh %34 : vector<8x128xf32>
    %cst_22 = arith.constant 1.000000e+00 : f32
    %36 = vector.broadcast %cst_22 : f32 to vector<8x128xf32>
    %37 = arith.addf %35, %36 : vector<8x128xf32>
    %cst_23 = arith.constant 5.000000e-01 : f32
    %38 = vector.broadcast %cst_23 : f32 to vector<8x128xf32>
    %39 = arith.mulf %38, %37 : vector<8x128xf32>
    %40 = arith.truncf %39 : vector<8x128xf32> to vector<8x128xbf16>
    %c0_24 = arith.constant 0 : index
    %c0_25 = arith.constant 0 : index
    %41 = vector.load %arg8[%c0_24, %c0_25] : memref<128x128xbf16, #tpu.memory_space<vmem>>, vector<128x128xbf16>
    %cst_26 = arith.constant dense<0.000000e+00> : vector<8x128xf32>
    %42 = tpu.matmul %40, %41, %cst_26 {dimension_numbers = #tpu.dot_dimension_numbers<[1], [0], [0], [1], [0, 0, 1, 1], [], []>} : vector<8x128xbf16>, vector<128x128xbf16>, vector<8x128xf32> -> vector<8x128xf32>
    %c0_27 = arith.constant 0 : index
    %c0_28 = arith.constant 0 : index
    %43 = vector.load %arg9[%c0_27, %c0_28] : memref<1x128xf32, #tpu.memory_space<vmem>>, vector<1x128xf32>
    %44 = vector.broadcast %43 : vector<1x128xf32> to vector<8x128xf32>
    %45 = arith.addf %42, %44 : vector<8x128xf32>
    %46 = arith.truncf %45 : vector<8x128xf32> to vector<8x128xbf16>
    %c0_29 = arith.constant 0 : index
    %c0_30 = arith.constant 0 : index
    %47 = vector.load %arg10[%c0_29, %c0_30] : memref<8x128xbf16, #tpu.memory_space<vmem>>, vector<8x128xbf16>
    tpu.vector_store %arg10[%c0_29, %c0_30], %46 {strides = array<i32>} : memref<8x128xbf16, #tpu.memory_space<vmem>>, vector<8x128xbf16>,
    return
  }
  func.func @transform_0(%arg0: i32) -> (i32, i32) {
    %c0_i32 = arith.constant 0 : i32
    %c0_i32_0 = arith.constant 0 : i32
    return %arg0, %c0_i32 : i32, i32
  }
  func.func @transform_1(%arg0: i32) -> (i32, i32) {
    %c0_i32 = arith.constant 0 : i32
    %c0_i32_0 = arith.constant 0 : i32
    %c0_i32_1 = arith.constant 0 : i32
    return %c0_i32, %c0_i32_0 : i32, i32
  }
  func.func @transform_2(%arg0: i32) -> (i32, i32) {
    %c0_i32 = arith.constant 0 : i32
    %c0_i32_0 = arith.constant 0 : i32
    %c0_i32_1 = arith.constant 0 : i32
    return %c0_i32, %c0_i32_0 : i32, i32
  }
  func.func @transform_3(%arg0: i32) -> (i32, i32) {
    %c0_i32 = arith.constant 0 : i32
    %c0_i32_0 = arith.constant 0 : i32
    %c0_i32_1 = arith.constant 0 : i32
    return %c0_i32, %c0_i32_0 : i32, i32
  }
  func.func @transform_4(%arg0: i32) -> (i32, i32) {
    %c0_i32 = arith.constant 0 : i32
    %c0_i32_0 = arith.constant 0 : i32
    %c0_i32_1 = arith.constant 0 : i32
    return %c0_i32, %c0_i32_0 : i32, i32
  }
  func.func @transform_5(%arg0: i32) -> (i32, i32) {
    %c0_i32 = arith.constant 0 : i32
    %c0_i32_0 = arith.constant 0 : i32
    %c0_i32_1 = arith.constant 0 : i32
    return %c0_i32, %c0_i32_0 : i32, i32
  }
  func.func @transform_6(%arg0: i32) -> (i32, i32) {
    %c0_i32 = arith.constant 0 : i32
    %c0_i32_0 = arith.constant 0 : i32
    %c0_i32_1 = arith.constant 0 : i32
    return %c0_i32, %c0_i32_0 : i32, i32
  }
  func.func @transform_7(%arg0: i32) -> (i32, i32) {
    %c0_i32 = arith.constant 0 : i32
    %c0_i32_0 = arith.constant 0 : i32
    %c0_i32_1 = arith.constant 0 : i32
    return %c0_i32, %c0_i32_0 : i32, i32
  }
  func.func @transform_8(%arg0: i32) -> (i32, i32) {
    %c0_i32 = arith.constant 0 : i32
    %c0_i32_0 = arith.constant 0 : i32
    %c0_i32_1 = arith.constant 0 : i32
    return %c0_i32, %c0_i32_0 : i32, i32
  }
  func.func @transform_9(%arg0: i32) -> (i32, i32) {
    %c0_i32 = arith.constant 0 : i32
    %c0_i32_0 = arith.constant 0 : i32
    return %arg0, %c0_i32 : i32, i32
  }
}

</mosaic_0001>

<llo_original>
// kernel: tpu_custom_call.1
$region0: #{tpu_custom_call.1}
  #allocation0 [shape = 'u32[]', space=smem, size = 0x4, offset = 0x4, fixed_abs, tag = 'smem constant byte address 0x4 - core index']
  #allocation1 [shape = 'u32[144,128]{1,0:T(1,128)}', space=vmem, size = 0x12000, scoped, tag = 'internal scratch']
  %s0 = inlined_call_operand.hbm [shape: f32[8,784], index: 0, kind: input, shape index: {}]
  %s1 = inlined_call_operand.hbm [shape: bf16[784,128], index: 1, kind: input, shape index: {}]
  %s2 = inlined_call_operand.vmem [shape: f32[1,128], index: 2, kind: input, shape index: {}]
  %s3 = inlined_call_operand.hbm [shape: bf16[128,128], index: 3, kind: input, shape index: {}]
  %s4 = inlined_call_operand.vmem [shape: f32[1,128], index: 4, kind: input, shape index: {}]
  %s5 = inlined_call_operand.hbm [shape: bf16[128,128], index: 5, kind: input, shape index: {}]
  %s6 = inlined_call_operand.vmem [shape: f32[1,128], index: 6, kind: input, shape index: {}]
  %s7 = inlined_call_operand.hbm [shape: bf16[128,128], index: 7, kind: input, shape index: {}]
  %s8 = inlined_call_operand.vmem [shape: f32[1,128], index: 8, kind: input, shape index: {}]
  %s9 = inlined_call_operand.hbm [shape: bf16[8,128], index: 9, kind: output, shape index: {}]
  %s10 = sld [smem:[#allocation0]]
  $region66: #{tpu_custom_call.1} parent=0
    _
  %s12 = ssub.s32 1, %s10
  %s13 = scalar_select 0, %s12, %s10
  $region1: #{tpu_custom_call.1} parent=0
    #allocation2 [shape = 'u8[28672]{0}', space=vmem, size = 0x7000, scoped, tag = 'input window, operand 0, single buffered']
    #allocation3 [shape = 's32[1]{0}', space=sflag, size = 0x4, scoped, tag = 'scoped memory for tpu_custom_call.1']
    #allocation4 [shape = 's32[1]{0}', space=sflag, size = 0x4, scoped, tag = 'scoped memory for tpu_custom_call.1']
    #allocation5 [shape = 'u8[200704]{0}', space=vmem, size = 0x31000, scoped, tag = 'input window, operand 1, single buffered']
    #allocation6 [shape = 's32[1]{0}', space=sflag, size = 0x4, scoped, tag = 'scoped memory for tpu_custom_call.1']
    #allocation7 [shape = 'u8[32768]{0}', space=vmem, size = 0x8000, scoped, tag = 'input window, operand 3, single buffered']
    #allocation8 [shape = 'u8[32768]{0}', space=vmem, size = 0x8000, scoped, tag = 'input window, operand 5, single buffered']
    #allocation9 [shape = 's32[1]{0}', space=sflag, size = 0x4, scoped, tag = 'scoped memory for tpu_custom_call.1']
    #allocation10 [shape = 'u8[32768]{0}', space=vmem, size = 0x8000, scoped, tag = 'input window, operand 7, single buffered']
    #allocation11 [shape = 'u8[2048]{0}', space=vmem, size = 0x800, scoped, tag = 'output window, operand 0, single buffered']
    %14 = vsyncpa [#allocation3], 0
    %15 = vsyncpa [#allocation6], 0
    %16 = vsyncpa [#allocation9], 0
    %17 = vsyncpa [#allocation4], 0
    // Predicated region
    $region2: #{tpu_custom_call.1} parent=1 // pred_check
      _
    $region3: #{tpu_custom_call.1} parent=1 // pred_check_branch
      %19 = sbr.rel (0) target = $region5
    $region4: #{tpu_custom_call.1} parent=1 // pred_region
      %s21 = ssub.s32 896, 896
      %22 = vsyncadd [#allocation3], %s21
      %s24 = sshll.u32 [#allocation2], 4
      %s25 = int_to_ptr.vmem [resolvable:$true] %s24
      %27 = dma.hbm_to_vmem [thread:$0]  %s0, 896, %s25, [#allocation3]
    $region5: #{tpu_custom_call.1} parent=1 // pred_fallthru
      _
    // Predicated region
    $region6: #{tpu_custom_call.1} parent=1 // pred_check
      _
    $region7: #{tpu_custom_call.1} parent=1 // pred_check_branch
      %29 = sbr.rel (0) target = $region9
    $region8: #{tpu_custom_call.1} parent=1 // pred_region
      %s31 = ssub.s32 6272, 6272
      %32 = vsyncadd [#allocation6], %s31
      %s33 = sshll.u32 [#allocation5], 4
      %s34 = int_to_ptr.vmem [resolvable:$true] %s33
      %39 = dma.hbm_to_vmem [thread:$0]  %s1, 6272, %s34, [#allocation6], 64, 64, 4
    $region9: #{tpu_custom_call.1} parent=1 // pred_fallthru
      _
    // Predicated region
    $region10: #{tpu_custom_call.1} parent=1 // pred_check
      _
    $region11: #{tpu_custom_call.1} parent=1 // pred_check_branch
      %41 = sbr.rel (0) target = $region13
    $region12: #{tpu_custom_call.1} parent=1 // pred_region
      _
    $region13: #{tpu_custom_call.1} parent=1 // pred_fallthru
      _
    // Predicated region
    $region14: #{tpu_custom_call.1} parent=1 // pred_check
      _
    $region15: #{tpu_custom_call.1} parent=1 // pred_check_branch
      %43 = sbr.rel (0) target = $region17
    $region16: #{tpu_custom_call.1} parent=1 // pred_region
      %s45 = ssub.s32 1024, 1024
      %46 = vsyncadd [#allocation6], %s45
      %s47 = sshll.u32 [#allocation7], 4
      %s48 = int_to_ptr.vmem [resolvable:$true] %s47
      %53 = dma.hbm_to_vmem [thread:$0]  %s3, 1024, %s48, [#allocation6], 64, 64, 4
    $region17: #{tpu_custom_call.1} parent=1 // pred_fallthru
      _
    // Predicated region
    $region18: #{tpu_custom_call.1} parent=1 // pred_check
      _
    $region19: #{tpu_custom_call.1} parent=1 // pred_check_branch
      %55 = sbr.rel (0) target = $region21
    $region20: #{tpu_custom_call.1} parent=1 // pred_region
      _
    $region21: #{tpu_custom_call.1} parent=1 // pred_fallthru
      _
    // Predicated region
    $region22: #{tpu_custom_call.1} parent=1 // pred_check
      _
    $region23: #{tpu_custom_call.1} parent=1 // pred_check_branch
      %57 = sbr.rel (0) target = $region25
    $region24: #{tpu_custom_call.1} parent=1 // pred_region
      %s59 = ssub.s32 1024, 1024
      %60 = vsyncadd [#allocation9], %s59
      %s61 = sshll.u32 [#allocation8], 4
      %s62 = int_to_ptr.vmem [resolvable:$true] %s61
      %67 = dma.hbm_to_vmem [thread:$0]  %s5, 1024, %s62, [#allocation9], 64, 64, 4
    $region25: #{tpu_custom_call.1} parent=1 // pred_fallthru
      _
    // Predicated region
    $region26: #{tpu_custom_call.1} parent=1 // pred_check
      _
    $region27: #{tpu_custom_call.1} parent=1 // pred_check_branch
      %69 = sbr.rel (0) target = $region29
    $region28: #{tpu_custom_call.1} parent=1 // pred_region
      _
    $region29: #{tpu_custom_call.1} parent=1 // pred_fallthru
      _
    // Predicated region
    $region30: #{tpu_custom_call.1} parent=1 // pred_check
      _
    $region31: #{tpu_custom_call.1} parent=1 // pred_check_branch
      %71 = sbr.rel (0) target = $region33
    $region32: #{tpu_custom_call.1} parent=1 // pred_region
      %s73 = ssub.s32 1024, 1024
      %74 = vsyncadd [#allocation9], %s73
      %s75 = sshll.u32 [#allocation10], 4
      %s76 = int_to_ptr.vmem [resolvable:$true] %s75
      %81 = dma.hbm_to_vmem [thread:$0]  %s7, 1024, %s76, [#allocation9], 64, 64, 4
    $region33: #{tpu_custom_call.1} parent=1 // pred_fallthru
      _
    // Predicated region
    $region34: #{tpu_custom_call.1} parent=1 // pred_check
      _
    $region35: #{tpu_custom_call.1} parent=1 // pred_check_branch
      %83 = sbr.rel (0) target = $region37
    $region36: #{tpu_custom_call.1} parent=1 // pred_region
      _
    $region37: #{tpu_custom_call.1} parent=1 // pred_fallthru
      _
    // Predicated region
    $region38: #{tpu_custom_call.1} parent=1 // pred_check
      _
    $region39: #{tpu_custom_call.1} parent=1 // pred_check_branch
      %85 = sbr.rel (0) target = $region41
    $region40: #{tpu_custom_call.1} parent=1 // pred_region
      %86 = dma.done [#allocation3], 896
    $region41: #{tpu_custom_call.1} parent=1 // pred_fallthru
      _
    // Predicated region
    $region42: #{tpu_custom_call.1} parent=1 // pred_check
      _
    $region43: #{tpu_custom_call.1} parent=1 // pred_check_branch
      %88 = sbr.rel (0) target = $region45
    $region44: #{tpu_custom_call.1} parent=1 // pred_region
      %89 = dma.done [#allocation6], 6272
    $region45: #{tpu_custom_call.1} parent=1 // pred_fallthru
      _
    // Predicated region
    $region46: #{tpu_custom_call.1} parent=1 // pred_check
      _
    $region47: #{tpu_custom_call.1} parent=1 // pred_check_branch
      %91 = sbr.rel (0) target = $region49
    $region48: #{tpu_custom_call.1} parent=1 // pred_region
      %92 = dma.done [#allocation6], 1024
    $region49: #{tpu_custom_call.1} parent=1 // pred_fallthru
      _
    // Predicated region
    $region50: #{tpu_custom_call.1} parent=1 // pred_check
      _
    $region51: #{tpu_custom_call.1} parent=1 // pred_check_branch
      %94 = sbr.rel (0) target = $region53
    $region52: #{tpu_custom_call.1} parent=1 // pred_region
      %95 = dma.done [#allocation9], 1024
    $region53: #{tpu_custom_call.1} parent=1 // pred_fallthru
      _
    // Predicated region
    $region54: #{tpu_custom_call.1} parent=1 // pred_check
      _
    $region55: #{tpu_custom_call.1} parent=1 // pred_check_branch
      %97 = sbr.rel (0) target = $region57
    $region56: #{tpu_custom_call.1} parent=1 // pred_region
      %98 = dma.done [#allocation9], 1024
    $region57: #{tpu_custom_call.1} parent=1 // pred_fallthru
      _
    %v100 = vld [vmem:[#allocation2] sm:$0xff]
    %v101 = vld [vmem:[#allocation2 + $0x8] sm:$0xff]
    %v102 = vld [vmem:[#allocation2 + $0x10] sm:$0xff]
    %v103 = vld [vmem:[#allocation2 + $0x18] sm:$0xff]
    %v104 = vld [vmem:[#allocation2 + $0x20] sm:$0xff]
    %v105 = vld [vmem:[#allocation2 + $0x28] sm:$0xff]
    %v106 = vld [vmem:[#allocation2 + $0x30] sm:$0xff]
    %v107 = vpack.c.bf16 %v100, %v100
    %v108 = vpack.c.bf16 %v101, %v101
    %v109 = vpack.c.bf16 %v102, %v102
    %v110 = vpack.c.bf16 %v103, %v103
    %v111 = vpack.c.bf16 %v104, %v104
    %v112 = vpack.c.bf16 %v105, %v105
    %v113 = vpack.c.bf16 %v106, %v106
    %v114 = vld [vmem:[#allocation5] sm:$0xf]
    %v115 = vld [vmem:[#allocation5 + $0x4] sm:$0xf]
    %v116 = vld [vmem:[#allocation5 + $0x8] sm:$0xf]
    %v117 = vld [vmem:[#allocation5 + $0xc] sm:$0xf]
    %v118 = vld [vmem:[#allocation5 + $0x10] sm:$0xf]
    %v119 = vld [vmem:[#allocation5 + $0x14] sm:$0xf]
    %v120 = vld [vmem:[#allocation5 + $0x18] sm:$0xf]
    %v121 = vld [vmem:[#allocation5 + $0x1c] sm:$0xf]
    %v122 = vld [vmem:[#allocation5 + $0x20] sm:$0xf]
    %v123 = vld [vmem:[#allocation5 + $0x24] sm:$0xf]
    %v124 = vld [vmem:[#allocation5 + $0x28] sm:$0xf]
    %v125 = vld [vmem:[#allocation5 + $0x2c] sm:$0xf]
    %v126 = vld [vmem:[#allocation5 + $0x30] sm:$0xf]
    %v127 = vld [vmem:[#allocation5 + $0x34] sm:$0xf]
    %v128 = vld [vmem:[#allocation5 + $0x38] sm:$0xf]
    %v129 = vld [vmem:[#allocation5 + $0x3c] sm:$0xf]
    %v130 = vld [vmem:[#allocation5 + $0x40] sm:$0xf]
    %v131 = vld [vmem:[#allocation5 + $0x44] sm:$0xf]
    %v132 = vld [vmem:[#allocation5 + $0x48] sm:$0xf]
    %v133 = vld [vmem:[#allocation5 + $0x4c] sm:$0xf]
    %v134 = vld [vmem:[#allocation5 + $0x50] sm:$0xf]
    %v135 = vld [vmem:[#allocation5 + $0x54] sm:$0xf]
    %v136 = vld [vmem:[#allocation5 + $0x58] sm:$0xf]
    %v137 = vld [vmem:[#allocation5 + $0x5c] sm:$0xf]
    %v138 = vld [vmem:[#allocation5 + $0x60] sm:$0xf]
    %v139 = vld [vmem:[#allocation5 + $0x64] sm:$0xf]
    %v140 = vld [vmem:[#allocation5 + $0x68] sm:$0xf]
    %v141 = vld [vmem:[#allocation5 + $0x6c] sm:$0xf]
    %v142 = vld [vmem:[#allocation5 + $0x70] sm:$0xf]
    %v143 = vld [vmem:[#allocation5 + $0x74] sm:$0xf]
    %v144 = vld [vmem:[#allocation5 + $0x78] sm:$0xf]
    %v145 = vld [vmem:[#allocation5 + $0x7c] sm:$0xf]
    %v146 = vld [vmem:[#allocation5 + $0x80] sm:$0xf]
    %v147 = vld [vmem:[#allocation5 + $0x84] sm:$0xf]
    %v148 = vld [vmem:[#allocation5 + $0x88] sm:$0xf]
    %v149 = vld [vmem:[#allocation5 + $0x8c] sm:$0xf]
    %v150 = vld [vmem:[#allocation5 + $0x90] sm:$0xf]
    %v151 = vld [vmem:[#allocation5 + $0x94] sm:$0xf]
    %v152 = vld [vmem:[#allocation5 + $0x98] sm:$0xf]
    %v153 = vld [vmem:[#allocation5 + $0x9c] sm:$0xf]
    %v154 = vld [vmem:[#allocation5 + $0xa0] sm:$0xf]
    %v155 = vld [vmem:[#allocation5 + $0xa4] sm:$0xf]
    %v156 = vld [vmem:[#allocation5 + $0xa8] sm:$0xf]
    %v157 = vld [vmem:[#allocation5 + $0xac] sm:$0xf]
    %v158 = vld [vmem:[#allocation5 + $0xb0] sm:$0xf]
    %v159 = vld [vmem:[#allocation5 + $0xb4] sm:$0xf]
    %v160 = vld [vmem:[#allocation5 + $0xb8] sm:$0xf]
    %v161 = vld [vmem:[#allocation5 + $0xbc] sm:$0xf]
    %v162 = vld [vmem:[#allocation5 + $0xc0] sm:$0xf]
    %v163 = vld [vmem:[#allocation5 + $0xc4] sm:$0xf]
    %v164 = vld [vmem:[#allocation5 + $0xc8] sm:$0xf]
    %v165 = vld [vmem:[#allocation5 + $0xcc] sm:$0xf]
    %v166 = vld [vmem:[#allocation5 + $0xd0] sm:$0xf]
    %v167 = vld [vmem:[#allocation5 + $0xd4] sm:$0xf]
    %v168 = vld [vmem:[#allocation5 + $0xd8] sm:$0xf]
    %v169 = vld [vmem:[#allocation5 + $0xdc] sm:$0xf]
    %v170 = vld [vmem:[#allocation5 + $0xe0] sm:$0xf]
    %v171 = vld [vmem:[#allocation5 + $0xe4] sm:$0xf]
    %v172 = vld [vmem:[#allocation5 + $0xe8] sm:$0xf]
    %v173 = vld [vmem:[#allocation5 + $0xec] sm:$0xf]
    %v174 = vld [vmem:[#allocation5 + $0xf0] sm:$0xf]
    %v175 = vld [vmem:[#allocation5 + $0xf4] sm:$0xf]
    %v176 = vld [vmem:[#allocation5 + $0xf8] sm:$0xf]
    %v177 = vld [vmem:[#allocation5 + $0xfc] sm:$0xf]
    %v178 = vld [vmem:[#allocation5 + $0x100] sm:$0xf]
    %v179 = vld [vmem:[#allocation5 + $0x104] sm:$0xf]
    %v180 = vld [vmem:[#allocation5 + $0x108] sm:$0xf]
    %v181 = vld [vmem:[#allocation5 + $0x10c] sm:$0xf]
    %v182 = vld [vmem:[#allocation5 + $0x110] sm:$0xf]
    %v183 = vld [vmem:[#allocation5 + $0x114] sm:$0xf]
    %v184 = vld [vmem:[#allocation5 + $0x118] sm:$0xf]
    %v185 = vld [vmem:[#allocation5 + $0x11c] sm:$0xf]
    %v186 = vld [vmem:[#allocation5 + $0x120] sm:$0xf]
    %v187 = vld [vmem:[#allocation5 + $0x124] sm:$0xf]
    %v188 = vld [vmem:[#allocation5 + $0x128] sm:$0xf]
    %v189 = vld [vmem:[#allocation5 + $0x12c] sm:$0xf]
    %v190 = vld [vmem:[#allocation5 + $0x130] sm:$0xf]
    %v191 = vld [vmem:[#allocation5 + $0x134] sm:$0xf]
    %v192 = vld [vmem:[#allocation5 + $0x138] sm:$0xf]
    %v193 = vld [vmem:[#allocation5 + $0x13c] sm:$0xf]
    %v194 = vld [vmem:[#allocation5 + $0x140] sm:$0xf]
    %v195 = vld [vmem:[#allocation5 + $0x144] sm:$0xf]
    %v196 = vld [vmem:[#allocation5 + $0x148] sm:$0xf]
    %v197 = vld [vmem:[#allocation5 + $0x14c] sm:$0xf]
    %v198 = vld [vmem:[#allocation5 + $0x150] sm:$0xf]
    %v199 = vld [vmem:[#allocation5 + $0x154] sm:$0xf]
    %v200 = vld [vmem:[#allocation5 + $0x158] sm:$0xf]
    %v201 = vld [vmem:[#allocation5 + $0x15c] sm:$0xf]
    %v202 = vld [vmem:[#allocation5 + $0x160] sm:$0xf]
    %v203 = vld [vmem:[#allocation5 + $0x164] sm:$0xf]
    %v204 = vld [vmem:[#allocation5 + $0x168] sm:$0xf]
    %v205 = vld [vmem:[#allocation5 + $0x16c] sm:$0xf]
    %v206 = vld [vmem:[#allocation5 + $0x170] sm:$0xf]
    %v207 = vld [vmem:[#allocation5 + $0x174] sm:$0xf]
    %v208 = vld [vmem:[#allocation5 + $0x178] sm:$0xf]
    %v209 = vld [vmem:[#allocation5 + $0x17c] sm:$0xf]
    %v210 = vld [vmem:[#allocation5 + $0x180] sm:$0xf]
    %v211 = vld [vmem:[#allocation5 + $0x184] sm:$0xf]
    %v212 = vld [vmem:[%s2] sm:$0x1]
    %v214 = vlaneseq
    %v215 = vshrl.u32 %v214, 7
    %v216 = vsub.s32 0, %v215
    %v217 = vrot.slane %v212, %v216
    %v317 = vunpack.c.l.b16 %v114
    %v318 = vunpack.c.l.b16 %v115
    %v319 = vunpack.c.l.b16 %v116
    %v320 = vunpack.c.l.b16 %v117
    %v321 = vunpack.c.l.b16 %v118
    %v322 = vunpack.c.l.b16 %v119
    %v323 = vunpack.c.l.b16 %v120
    %v324 = vunpack.c.l.b16 %v121
    %v325 = vunpack.c.l.b16 %v122
    %v326 = vunpack.c.l.b16 %v123
    %v327 = vunpack.c.l.b16 %v124
    %v328 = vunpack.c.l.b16 %v125
    %v329 = vunpack.c.l.b16 %v126
    %v330 = vunpack.c.l.b16 %v127
    %v331 = vunpack.c.l.b16 %v128
    %v332 = vunpack.c.l.b16 %v129
    %v333 = vunpack.c.l.b16 %v130
    %v334 = vunpack.c.l.b16 %v131
    %v335 = vunpack.c.l.b16 %v132
    %v336 = vunpack.c.l.b16 %v133
    %v337 = vunpack.c.l.b16 %v134
    %v338 = vunpack.c.l.b16 %v135
    %v339 = vunpack.c.l.b16 %v136
    %v340 = vunpack.c.l.b16 %v137
    %v341 = vunpack.c.l.b16 %v138
    %v342 = vunpack.c.l.b16 %v139
    %v343 = vunpack.c.l.b16 %v140
    %v344 = vunpack.c.l.b16 %v141
    %v345 = vunpack.c.l.b16 %v142
    %v346 = vunpack.c.l.b16 %v143
    %v347 = vunpack.c.l.b16 %v144
    %v348 = vunpack.c.l.b16 %v145
    %v349 = vunpack.c.l.b16 %v146
    %v350 = vunpack.c.l.b16 %v147
    %v351 = vunpack.c.l.b16 %v148
    %v352 = vunpack.c.l.b16 %v149
    %v353 = vunpack.c.l.b16 %v150
    %v354 = vunpack.c.l.b16 %v151
    %v355 = vunpack.c.l.b16 %v152
    %v356 = vunpack.c.l.b16 %v153
    %v357 = vunpack.c.l.b16 %v154
    %v358 = vunpack.c.l.b16 %v155
    %v359 = vunpack.c.l.b16 %v156
    %v360 = vunpack.c.l.b16 %v157
    %v361 = vunpack.c.l.b16 %v158
    %v362 = vunpack.c.l.b16 %v159
    %v363 = vunpack.c.l.b16 %v160
    %v364 = vunpack.c.l.b16 %v161
    %v365 = vunpack.c.l.b16 %v162
    %v366 = vunpack.c.l.b16 %v163
    %v367 = vunpack.c.l.b16 %v164
    %v368 = vunpack.c.l.b16 %v165
    %v369 = vunpack.c.l.b16 %v166
    %v370 = vunpack.c.l.b16 %v167
    %v371 = vunpack.c.l.b16 %v168
    %v372 = vunpack.c.l.b16 %v169
    %v373 = vunpack.c.l.b16 %v170
    %v374 = vunpack.c.l.b16 %v171
    %v375 = vunpack.c.l.b16 %v172
    %v376 = vunpack.c.l.b16 %v173
    %v377 = vunpack.c.l.b16 %v174
    %v378 = vunpack.c.l.b16 %v175
    %v379 = vunpack.c.l.b16 %v176
    %v380 = vunpack.c.l.b16 %v177
    %v381 = vunpack.c.l.b16 %v178
    %v382 = vunpack.c.l.b16 %v179
    %v383 = vunpack.c.l.b16 %v180
    %v384 = vunpack.c.l.b16 %v181
    %v385 = vunpack.c.l.b16 %v182
    %v386 = vunpack.c.l.b16 %v183
    %v387 = vunpack.c.l.b16 %v184
    %v388 = vunpack.c.l.b16 %v185
    %v389 = vunpack.c.l.b16 %v186
    %v390 = vunpack.c.l.b16 %v187
    %v391 = vunpack.c.l.b16 %v188
    %v392 = vunpack.c.l.b16 %v189
    %v393 = vunpack.c.l.b16 %v190
    %v394 = vunpack.c.l.b16 %v191
    %v395 = vunpack.c.l.b16 %v192
    %v396 = vunpack.c.l.b16 %v193
    %v397 = vunpack.c.l.b16 %v194
    %v398 = vunpack.c.l.b16 %v195
    %v399 = vunpack.c.l.b16 %v196
    %v400 = vunpack.c.l.b16 %v197
    %v401 = vunpack.c.l.b16 %v198
    %v402 = vunpack.c.l.b16 %v199
    %v403 = vunpack.c.l.b16 %v200
    %v404 = vunpack.c.l.b16 %v201
    %v405 = vunpack.c.l.b16 %v202
    %v406 = vunpack.c.l.b16 %v203
    %v407 = vunpack.c.l.b16 %v204
    %v408 = vunpack.c.l.b16 %v205
    %v409 = vunpack.c.l.b16 %v206
    %v410 = vunpack.c.l.b16 %v207
    %v411 = vunpack.c.l.b16 %v208
    %v412 = vunpack.c.l.b16 %v209
    %v413 = vunpack.c.l.b16 %v210
    %v414 = vunpack.c.l.b16 %v211
    %v415 = vpack.c.b16 %v318, %v317
    %v416 = vpack.c.b16 %v320, %v319
    %v417 = vpack.c.b16 %v322, %v321
    %v418 = vpack.c.b16 %v324, %v323
    %v419 = vpack.c.b16 %v326, %v325
    %v420 = vpack.c.b16 %v328, %v327
    %v421 = vpack.c.b16 %v330, %v329
    %v422 = vpack.c.b16 %v332, %v331
    %v423 = vpack.c.b16 %v334, %v333
    %v424 = vpack.c.b16 %v336, %v335
    %v425 = vpack.c.b16 %v338, %v337
    %v426 = vpack.c.b16 %v340, %v339
    %v427 = vpack.c.b16 %v342, %v341
    %v428 = vpack.c.b16 %v344, %v343
    %v429 = vpack.c.b16 %v346, %v345
    %v430 = vpack.c.b16 %v348, %v347
    %v431 = vpack.c.b16 %v350, %v349
    %v432 = vpack.c.b16 %v352, %v351
    %v433 = vpack.c.b16 %v354, %v353
    %v434 = vpack.c.b16 %v356, %v355
    %v435 = vpack.c.b16 %v358, %v357
    %v436 = vpack.c.b16 %v360, %v359
    %v437 = vpack.c.b16 %v362, %v361
    %v438 = vpack.c.b16 %v364, %v363
    %v439 = vpack.c.b16 %v366, %v365
    %v440 = vpack.c.b16 %v368, %v367
    %v441 = vpack.c.b16 %v370, %v369
    %v442 = vpack.c.b16 %v372, %v371
    %v443 = vpack.c.b16 %v374, %v373
    %v444 = vpack.c.b16 %v376, %v375
    %v445 = vpack.c.b16 %v378, %v377
    %v446 = vpack.c.b16 %v380, %v379
    %v447 = vpack.c.b16 %v382, %v381
    %v448 = vpack.c.b16 %v384, %v383
    %v449 = vpack.c.b16 %v386, %v385
    %v450 = vpack.c.b16 %v388, %v387
    %v451 = vpack.c.b16 %v390, %v389
    %v452 = vpack.c.b16 %v392, %v391
    %v453 = vpack.c.b16 %v394, %v393
    %v454 = vpack.c.b16 %v396, %v395
    %v455 = vpack.c.b16 %v398, %v397
    %v456 = vpack.c.b16 %v400, %v399
    %v457 = vpack.c.b16 %v402, %v401
    %v458 = vpack.c.b16 %v404, %v403
    %v459 = vpack.c.b16 %v406, %v405
    %v460 = vpack.c.b16 %v408, %v407
    %v461 = vpack.c.b16 %v410, %v409
    %v462 = vpack.c.b16 %v412, %v411
    %v463 = vpack.c.b16 %v414, %v413
    %vm513 = vcmask 130048
    %v515 = vsel %vm513, %v113, 0
    %517 = vmatprep.subr.bf16.mxu0 0
    %518 = vmatpush1.bf16.msra.mxu0 %v422
    %519 = vmatprep.subr.bf16.mxu0 0
    %520 = vmatpush1.bf16.msra.mxu0 %v421
    %521 = vmatprep.subr.bf16.mxu0 0
    %522 = vmatpush1.bf16.msra.mxu0 %v420
    %523 = vmatprep.subr.bf16.mxu0 0
    %524 = vmatpush1.bf16.msra.mxu0 %v419
    %525 = vmatprep.subr.bf16.mxu0 0
    %526 = vmatpush1.bf16.msra.mxu0 %v418
    %527 = vmatprep.subr.bf16.mxu0 0
    %528 = vmatpush1.bf16.msra.mxu0 %v417
    %529 = vmatprep.subr.bf16.mxu0 0
    %530 = vmatpush1.bf16.msra.mxu0 %v416
    %531 = vmatprep.subr.bf16.mxu0 0
    %532 = vmatpush1.bf16.msra.mxu0 %v415
    %533 = vmatprep.subr.bf16.mxu0 0
    %534 = vmatpush2.bf16.msra.mxu0 %v430
    %535 = vmatprep.subr.bf16.mxu0 0
    %536 = vmatpush2.bf16.msra.mxu0 %v429
    %537 = vmatprep.subr.bf16.mxu0 0
    %538 = vmatpush2.bf16.msra.mxu0 %v428
    %539 = vmatprep.subr.bf16.mxu0 0
    %540 = vmatpush2.bf16.msra.mxu0 %v427
    %541 = vmatprep.subr.bf16.mxu0 0
    %542 = vmatpush2.bf16.msra.mxu0 %v426
    %543 = vmatprep.subr.bf16.mxu0 0
    %544 = vmatpush2.bf16.msra.mxu0 %v425
    %545 = vmatprep.subr.bf16.mxu0 0
    %546 = vmatpush2.bf16.msra.mxu0 %v424
    %547 = vmatprep.subr.bf16.mxu0 0
    %548 = vmatpush2.bf16.msra.mxu0 %v423
    %549 = vmatprep.mubr.bf16.mxu0 %v108
    %550 = vmatmul.mubr.bf16.gmra.mxu0 %v107
    %v551 = vpop.f32.mrf.mxu0
    %v552 = vadd.f32 %v217, %v551
    %v553 = vpop.f32.mrf.mxu0
    %v554 = vpop.f32.mrf.mxu0
    %v555 = vpop.f32.mrf.mxu0
    %556 = vdwg.mxu0
    %557 = vmatprep.subr.bf16.mxu0 0
    %558 = vmatpush1.bf16.msra.mxu0 %v438
    %559 = vmatprep.subr.bf16.mxu0 0
    %560 = vmatpush1.bf16.msra.mxu0 %v437
    %561 = vmatprep.subr.bf16.mxu0 0
    %562 = vmatpush1.bf16.msra.mxu0 %v436
    %563 = vmatprep.subr.bf16.mxu0 0
    %564 = vmatpush1.bf16.msra.mxu0 %v435
    %565 = vmatprep.subr.bf16.mxu0 0
    %566 = vmatpush1.bf16.msra.mxu0 %v434
    %567 = vmatprep.subr.bf16.mxu0 0
    %568 = vmatpush1.bf16.msra.mxu0 %v433
    %569 = vmatprep.subr.bf16.mxu0 0
    %570 = vmatpush1.bf16.msra.mxu0 %v432
    %571 = vmatprep.subr.bf16.mxu0 0
    %572 = vmatpush1.bf16.msra.mxu0 %v431
    %573 = vmatprep.subr.bf16.mxu0 0
    %574 = vmatpush2.bf16.msra.mxu0 %v446
    %575 = vmatprep.subr.bf16.mxu0 0
    %576 = vmatpush2.bf16.msra.mxu0 %v445
    %577 = vmatprep.subr.bf16.mxu0 0
    %578 = vmatpush2.bf16.msra.mxu0 %v444
    %579 = vmatprep.subr.bf16.mxu0 0
    %580 = vmatpush2.bf16.msra.mxu0 %v443
    %581 = vmatprep.subr.bf16.mxu0 0
    %582 = vmatpush2.bf16.msra.mxu0 %v442
    %583 = vmatprep.subr.bf16.mxu0 0
    %584 = vmatpush2.bf16.msra.mxu0 %v441
    %585 = vmatprep.subr.bf16.mxu0 0
    %586 = vmatpush2.bf16.msra.mxu0 %v440
    %587 = vmatprep.subr.bf16.mxu0 0
    %588 = vmatpush2.bf16.msra.mxu0 %v439
    %589 = vmatprep.mubr.bf16.mxu0 %v110
    %590 = vmatmul.mubr.bf16.gmra.mxu0 %v109
    %v591 = vpop.f32.mrf.mxu0
    %v592 = vadd.f32 %v552, %v591
    %v593 = vpop.f32.mrf.mxu0
    %v594 = vpop.f32.mrf.mxu0
    %v595 = vpop.f32.mrf.mxu0
    %596 = vdwg.mxu0
    %597 = vmatprep.subr.bf16.mxu0 0
    %598 = vmatpush1.bf16.msra.mxu0 %v454
    %599 = vmatprep.subr.bf16.mxu0 0
    %600 = vmatpush1.bf16.msra.mxu0 %v453
    %601 = vmatprep.subr.bf16.mxu0 0
    %602 = vmatpush1.bf16.msra.mxu0 %v452
    %603 = vmatprep.subr.bf16.mxu0 0
    %604 = vmatpush1.bf16.msra.mxu0 %v451
    %605 = vmatprep.subr.bf16.mxu0 0
    %606 = vmatpush1.bf16.msra.mxu0 %v450
    %607 = vmatprep.subr.bf16.mxu0 0
    %608 = vmatpush1.bf16.msra.mxu0 %v449
    %609 = vmatprep.subr.bf16.mxu0 0
    %610 = vmatpush1.bf16.msra.mxu0 %v448
    %611 = vmatprep.subr.bf16.mxu0 0
    %612 = vmatpush1.bf16.msra.mxu0 %v447
    %613 = vmatprep.subr.bf16.mxu0 0
    %614 = vmatpush2.bf16.msra.mxu0 %v462
    %615 = vmatprep.subr.bf16.mxu0 0
    %616 = vmatpush2.bf16.msra.mxu0 %v461
    %617 = vmatprep.subr.bf16.mxu0 0
    %618 = vmatpush2.bf16.msra.mxu0 %v460
    %619 = vmatprep.subr.bf16.mxu0 0
    %620 = vmatpush2.bf16.msra.mxu0 %v459
    %621 = vmatprep.subr.bf16.mxu0 0
    %622 = vmatpush2.bf16.msra.mxu0 %v458
    %623 = vmatprep.subr.bf16.mxu0 0
    %624 = vmatpush2.bf16.msra.mxu0 %v457
    %625 = vmatprep.subr.bf16.mxu0 0
    %626 = vmatpush2.bf16.msra.mxu0 %v456
    %627 = vmatprep.subr.bf16.mxu0 0
    %628 = vmatpush2.bf16.msra.mxu0 %v455
    %629 = vmatprep.mubr.bf16.mxu0 %v112
    %630 = vmatmul.mubr.bf16.gmra.mxu0 %v111
    %v631 = vpop.f32.mrf.mxu0
    %v632 = vadd.f32 %v592, %v631
    %v633 = vpop.f32.mrf.mxu0
    %v634 = vpop.f32.mrf.mxu0
    %v635 = vpop.f32.mrf.mxu0
    %636 = vdwg.mxu0
    %637 = vmatprep.subr.bf16.mxu0 0
    %638 = vmatpush1.bf16.msra.mxu0 0
    %639 = vmatprep.subr.bf16.mxu0 0
    %640 = vmatpush1.bf16.msra.mxu0 0
    %641 = vmatprep.subr.bf16.mxu0 0
    %642 = vmatpush1.bf16.msra.mxu0 0
    %643 = vmatprep.subr.bf16.mxu0 0
    %644 = vmatpush1.bf16.msra.mxu0 0
    %645 = vmatprep.subr.bf16.mxu0 0
    %646 = vmatpush1.bf16.msra.mxu0 0
    %647 = vmatprep.subr.bf16.mxu0 0
    %648 = vmatpush1.bf16.msra.mxu0 0
    %649 = vmatprep.subr.bf16.mxu0 0
    %650 = vmatpush1.bf16.msra.mxu0 0
    %651 = vmatprep.subr.bf16.mxu0 0
    %652 = vmatpush1.bf16.msra.mxu0 %v463
    %653 = vmatprep.subr.bf16.mxu0 0
    %654 = vmatpush2.bf16.msra.mxu0 0
    %655 = vmatprep.subr.bf16.mxu0 0
    %656 = vmatpush2.bf16.msra.mxu0 0
    %657 = vmatprep.subr.bf16.mxu0 0
    %658 = vmatpush2.bf16.msra.mxu0 0
    %659 = vmatprep.subr.bf16.mxu0 0
    %660 = vmatpush2.bf16.msra.mxu0 0
    %661 = vmatprep.subr.bf16.mxu0 0
    %662 = vmatpush2.bf16.msra.mxu0 0
    %663 = vmatprep.subr.bf16.mxu0 0
    %664 = vmatpush2.bf16.msra.mxu0 0
    %665 = vmatprep.subr.bf16.mxu0 0
    %666 = vmatpush2.bf16.msra.mxu0 0
    %667 = vmatprep.subr.bf16.mxu0 0
    %668 = vmatpush2.bf16.msra.mxu0 0
    %669 = vmatprep.mubr.bf16.mxu0 0
    %670 = vmatmul.mubr.bf16.gmra.mxu0 %v515
    %v671 = vpop.f32.mrf.mxu0
    %v672 = vadd.f32 %v632, %v671
    %v673 = vpop.f32.mrf.mxu0
    %v674 = vpop.f32.mrf.mxu0
    %v675 = vpop.f32.mrf.mxu0
    %676 = vdwg.mxu0
    %v677 = vmul.f32 %v672, 0.5
    %v678 = vtanh.pop %v677
    %v679 = vadd.f32 %v678, 1.0
    %v680 = vmul.f32 %v679, 0.5
    %v681 = vpack.c.bf16 %v680, %v680
    %v682 = vld [vmem:[#allocation7] sm:$0xf]
    %v683 = vld [vmem:[#allocation7 + $0x4] sm:$0xf]
    %v684 = vld [vmem:[#allocation7 + $0x8] sm:$0xf]
    %v685 = vld [vmem:[#allocation7 + $0xc] sm:$0xf]
    %v686 = vld [vmem:[#allocation7 + $0x10] sm:$0xf]
    %v687 = vld [vmem:[#allocation7 + $0x14] sm:$0xf]
    %v688 = vld [vmem:[#allocation7 + $0x18] sm:$0xf]
    %v689 = vld [vmem:[#allocation7 + $0x1c] sm:$0xf]
    %v690 = vld [vmem:[#allocation7 + $0x20] sm:$0xf]
    %v691 = vld [vmem:[#allocation7 + $0x24] sm:$0xf]
    %v692 = vld [vmem:[#allocation7 + $0x28] sm:$0xf]
    %v693 = vld [vmem:[#allocation7 + $0x2c] sm:$0xf]
    %v694 = vld [vmem:[#allocation7 + $0x30] sm:$0xf]
    %v695 = vld [vmem:[#allocation7 + $0x34] sm:$0xf]
    %v696 = vld [vmem:[#allocation7 + $0x38] sm:$0xf]
    %v697 = vld [vmem:[#allocation7 + $0x3c] sm:$0xf]
    %v698 = vld [vmem:[%s4] sm:$0x1]
    %v700 = vlaneseq
    %v701 = vshrl.u32 %v700, 7
    %v702 = vsub.s32 0, %v701
    %v703 = vrot.slane %v698, %v702
    %v721 = vunpack.c.l.b16 %v682
    %v722 = vunpack.c.l.b16 %v683
    %v723 = vunpack.c.l.b16 %v684
    %v724 = vunpack.c.l.b16 %v685
    %v725 = vunpack.c.l.b16 %v686
    %v726 = vunpack.c.l.b16 %v687
    %v727 = vunpack.c.l.b16 %v688
    %v728 = vunpack.c.l.b16 %v689
    %v729 = vunpack.c.l.b16 %v690
    %v730 = vunpack.c.l.b16 %v691
    %v731 = vunpack.c.l.b16 %v692
    %v732 = vunpack.c.l.b16 %v693
    %v733 = vunpack.c.l.b16 %v694
    %v734 = vunpack.c.l.b16 %v695
    %v735 = vunpack.c.l.b16 %v696
    %v736 = vunpack.c.l.b16 %v697
    %v737 = vpack.c.b16 %v722, %v721
    %v738 = vpack.c.b16 %v724, %v723
    %v739 = vpack.c.b16 %v726, %v725
    %v740 = vpack.c.b16 %v728, %v727
    %v741 = vpack.c.b16 %v730, %v729
    %v742 = vpack.c.b16 %v732, %v731
    %v743 = vpack.c.b16 %v734, %v733
    %v744 = vpack.c.b16 %v736, %v735
    %753 = vmatprep.subr.bf16.mxu0 0
    %754 = vmatpush1.bf16.msra.mxu0 %v744
    %755 = vmatprep.subr.bf16.mxu0 0
    %756 = vmatpush1.bf16.msra.mxu0 %v743
    %757 = vmatprep.subr.bf16.mxu0 0
    %758 = vmatpush1.bf16.msra.mxu0 %v742
    %759 = vmatprep.subr.bf16.mxu0 0
    %760 = vmatpush1.bf16.msra.mxu0 %v741
    %761 = vmatprep.subr.bf16.mxu0 0
    %762 = vmatpush1.bf16.msra.mxu0 %v740
    %763 = vmatprep.subr.bf16.mxu0 0
    %764 = vmatpush1.bf16.msra.mxu0 %v739
    %765 = vmatprep.subr.bf16.mxu0 0
    %766 = vmatpush1.bf16.msra.mxu0 %v738
    %767 = vmatprep.subr.bf16.mxu0 0
    %768 = vmatpush1.bf16.msra.mxu0 %v737
    %769 = vmatprep.subr.bf16.mxu0 0
    %770 = vmatpush2.bf16.msra.mxu0 0
    %771 = vmatprep.subr.bf16.mxu0 0
    %772 = vmatpush2.bf16.msra.mxu0 0
    %773 = vmatprep.subr.bf16.mxu0 0
    %774 = vmatpush2.bf16.msra.mxu0 0
    %775 = vmatprep.subr.bf16.mxu0 0
    %776 = vmatpush2.bf16.msra.mxu0 0
    %777 = vmatprep.subr.bf16.mxu0 0
    %778 = vmatpush2.bf16.msra.mxu0 0
    %779 = vmatprep.subr.bf16.mxu0 0
    %780 = vmatpush2.bf16.msra.mxu0 0
    %781 = vmatprep.subr.bf16.mxu0 0
    %782 = vmatpush2.bf16.msra.mxu0 0
    %783 = vmatprep.subr.bf16.mxu0 0
    %784 = vmatpush2.bf16.msra.mxu0 0
    %785 = vmatprep.mubr.bf16.mxu0 0
    %786 = vmatmul.mubr.bf16.gmra.mxu0 %v681
    %v787 = vpop.f32.mrf.mxu0
    %v788 = vadd.f32 %v703, %v787
    %v789 = vpop.f32.mrf.mxu0
    %v790 = vpop.f32.mrf.mxu0
    %v791 = vpop.f32.mrf.mxu0
    %792 = vdwg.mxu0
    %v793 = vmul.f32 %v788, 0.5
    %v794 = vtanh.pop %v793
    %v795 = vadd.f32 %v794, 1.0
    %v796 = vmul.f32 %v795, 0.5
    %v797 = vpack.c.bf16 %v796, %v796
    %v798 = vld [vmem:[#allocation8] sm:$0xf]
    %v799 = vld [vmem:[#allocation8 + $0x4] sm:$0xf]
    %v800 = vld [vmem:[#allocation8 + $0x8] sm:$0xf]
    %v801 = vld [vmem:[#allocation8 + $0xc] sm:$0xf]
    %v802 = vld [vmem:[#allocation8 + $0x10] sm:$0xf]
    %v803 = vld [vmem:[#allocation8 + $0x14] sm:$0xf]
    %v804 = vld [vmem:[#allocation8 + $0x18] sm:$0xf]
    %v805 = vld [vmem:[#allocation8 + $0x1c] sm:$0xf]
    %v806 = vld [vmem:[#allocation8 + $0x20] sm:$0xf]
    %v807 = vld [vmem:[#allocation8 + $0x24] sm:$0xf]
    %v808 = vld [vmem:[#allocation8 + $0x28] sm:$0xf]
    %v809 = vld [vmem:[#allocation8 + $0x2c] sm:$0xf]
    %v810 = vld [vmem:[#allocation8 + $0x30] sm:$0xf]
    %v811 = vld [vmem:[#allocation8 + $0x34] sm:$0xf]
    %v812 = vld [vmem:[#allocation8 + $0x38] sm:$0xf]
    %v813 = vld [vmem:[#allocation8 + $0x3c] sm:$0xf]
    %v814 = vld [vmem:[%s6] sm:$0x1]
    %v816 = vlaneseq
    %v817 = vshrl.u32 %v816, 7
    %v818 = vsub.s32 0, %v817
    %v819 = vrot.slane %v814, %v818
    %v837 = vunpack.c.l.b16 %v798
    %v838 = vunpack.c.l.b16 %v799
    %v839 = vunpack.c.l.b16 %v800
    %v840 = vunpack.c.l.b16 %v801
    %v841 = vunpack.c.l.b16 %v802
    %v842 = vunpack.c.l.b16 %v803
    %v843 = vunpack.c.l.b16 %v804
    %v844 = vunpack.c.l.b16 %v805
    %v845 = vunpack.c.l.b16 %v806
    %v846 = vunpack.c.l.b16 %v807
    %v847 = vunpack.c.l.b16 %v808
    %v848 = vunpack.c.l.b16 %v809
    %v849 = vunpack.c.l.b16 %v810
    %v850 = vunpack.c.l.b16 %v811
    %v851 = vunpack.c.l.b16 %v812
    %v852 = vunpack.c.l.b16 %v813
    %v853 = vpack.c.b16 %v838, %v837
    %v854 = vpack.c.b16 %v840, %v839
    %v855 = vpack.c.b16 %v842, %v841
    %v856 = vpack.c.b16 %v844, %v843
    %v857 = vpack.c.b16 %v846, %v845
    %v858 = vpack.c.b16 %v848, %v847
    %v859 = vpack.c.b16 %v850, %v849
    %v860 = vpack.c.b16 %v852, %v851
    %869 = vmatprep.subr.bf16.mxu0 0
    %870 = vmatpush1.bf16.msra.mxu0 %v860
    %871 = vmatprep.subr.bf16.mxu0 0
    %872 = vmatpush1.bf16.msra.mxu0 %v859
    %873 = vmatprep.subr.bf16.mxu0 0
    %874 = vmatpush1.bf16.msra.mxu0 %v858
    %875 = vmatprep.subr.bf16.mxu0 0
    %876 = vmatpush1.bf16.msra.mxu0 %v857
    %877 = vmatprep.subr.bf16.mxu0 0
    %878 = vmatpush1.bf16.msra.mxu0 %v856
    %879 = vmatprep.subr.bf16.mxu0 0
    %880 = vmatpush1.bf16.msra.mxu0 %v855
    %881 = vmatprep.subr.bf16.mxu0 0
    %882 = vmatpush1.bf16.msra.mxu0 %v854
    %883 = vmatprep.subr.bf16.mxu0 0
    %884 = vmatpush1.bf16.msra.mxu0 %v853
    %885 = vmatprep.subr.bf16.mxu0 0
    %886 = vmatpush2.bf16.msra.mxu0 0
    %887 = vmatprep.subr.bf16.mxu0 0
    %888 = vmatpush2.bf16.msra.mxu0 0
    %889 = vmatprep.subr.bf16.mxu0 0
    %890 = vmatpush2.bf16.msra.mxu0 0
    %891 = vmatprep.subr.bf16.mxu0 0
    %892 = vmatpush2.bf16.msra.mxu0 0
    %893 = vmatprep.subr.bf16.mxu0 0
    %894 = vmatpush2.bf16.msra.mxu0 0
    %895 = vmatprep.subr.bf16.mxu0 0
    %896 = vmatpush2.bf16.msra.mxu0 0
    %897 = vmatprep.subr.bf16.mxu0 0
    %898 = vmatpush2.bf16.msra.mxu0 0
    %899 = vmatprep.subr.bf16.mxu0 0
    %900 = vmatpush2.bf16.msra.mxu0 0
    %901 = vmatprep.mubr.bf16.mxu0 0
    %902 = vmatmul.mubr.bf16.gmra.mxu0 %v797
    %v903 = vpop.f32.mrf.mxu0
    %v904 = vadd.f32 %v819, %v903
    %v905 = vpop.f32.mrf.mxu0
    %v906 = vpop.f32.mrf.mxu0
    %v907 = vpop.f32.mrf.mxu0
    %908 = vdwg.mxu0
    %v909 = vmul.f32 %v904, 0.5
    %v910 = vtanh.pop %v909
    %v911 = vadd.f32 %v910, 1.0
    %v912 = vmul.f32 %v911, 0.5
    %v913 = vpack.c.bf16 %v912, %v912
    %v914 = vld [vmem:[#allocation10] sm:$0xf]
    %v915 = vld [vmem:[#allocation10 + $0x4] sm:$0xf]
    %v916 = vld [vmem:[#allocation10 + $0x8] sm:$0xf]
    %v917 = vld [vmem:[#allocation10 + $0xc] sm:$0xf]
    %v918 = vld [vmem:[#allocation10 + $0x10] sm:$0xf]
    %v919 = vld [vmem:[#allocation10 + $0x14] sm:$0xf]
    %v920 = vld [vmem:[#allocation10 + $0x18] sm:$0xf]
    %v921 = vld [vmem:[#allocation10 + $0x1c] sm:$0xf]
    %v922 = vld [vmem:[#allocation10 + $0x20] sm:$0xf]
    %v923 = vld [vmem:[#allocation10 + $0x24] sm:$0xf]
    %v924 = vld [vmem:[#allocation10 + $0x28] sm:$0xf]
    %v925 = vld [vmem:[#allocation10 + $0x2c] sm:$0xf]
    %v926 = vld [vmem:[#allocation10 + $0x30] sm:$0xf]
    %v927 = vld [vmem:[#allocation10 + $0x34] sm:$0xf]
    %v928 = vld [vmem:[#allocation10 + $0x38] sm:$0xf]
    %v929 = vld [vmem:[#allocation10 + $0x3c] sm:$0xf]
    %v930 = vld [vmem:[%s8] sm:$0x1]
    %v932 = vlaneseq
    %v933 = vshrl.u32 %v932, 7
    %v934 = vsub.s32 0, %v933
    %v935 = vrot.slane %v930, %v934
    %v953 = vunpack.c.l.b16 %v914
    %v954 = vunpack.c.l.b16 %v915
    %v955 = vunpack.c.l.b16 %v916
    %v956 = vunpack.c.l.b16 %v917
    %v957 = vunpack.c.l.b16 %v918
    %v958 = vunpack.c.l.b16 %v919
    %v959 = vunpack.c.l.b16 %v920
    %v960 = vunpack.c.l.b16 %v921
    %v961 = vunpack.c.l.b16 %v922
    %v962 = vunpack.c.l.b16 %v923
    %v963 = vunpack.c.l.b16 %v924
    %v964 = vunpack.c.l.b16 %v925
    %v965 = vunpack.c.l.b16 %v926
    %v966 = vunpack.c.l.b16 %v927
    %v967 = vunpack.c.l.b16 %v928
    %v968 = vunpack.c.l.b16 %v929
    %v969 = vpack.c.b16 %v954, %v953
    %v970 = vpack.c.b16 %v956, %v955
    %v971 = vpack.c.b16 %v958, %v957
    %v972 = vpack.c.b16 %v960, %v959
    %v973 = vpack.c.b16 %v962, %v961
    %v974 = vpack.c.b16 %v964, %v963
    %v975 = vpack.c.b16 %v966, %v965
    %v976 = vpack.c.b16 %v968, %v967
    %985 = vmatprep.subr.bf16.mxu0 0
    %986 = vmatpush1.bf16.msra.mxu0 %v976
    %987 = vmatprep.subr.bf16.mxu0 0
    %988 = vmatpush1.bf16.msra.mxu0 %v975
    %989 = vmatprep.subr.bf16.mxu0 0
    %990 = vmatpush1.bf16.msra.mxu0 %v974
    %991 = vmatprep.subr.bf16.mxu0 0
    %992 = vmatpush1.bf16.msra.mxu0 %v973
    %993 = vmatprep.subr.bf16.mxu0 0
    %994 = vmatpush1.bf16.msra.mxu0 %v972
    %995 = vmatprep.subr.bf16.mxu0 0
    %996 = vmatpush1.bf16.msra.mxu0 %v971
    %997 = vmatprep.subr.bf16.mxu0 0
    %998 = vmatpush1.bf16.msra.mxu0 %v970
    %999 = vmatprep.subr.bf16.mxu0 0
    %1000 = vmatpush1.bf16.msra.mxu0 %v969
    %1001 = vmatprep.subr.bf16.mxu0 0
    %1002 = vmatpush2.bf16.msra.mxu0 0
    %1003 = vmatprep.subr.bf16.mxu0 0
    %1004 = vmatpush2.bf16.msra.mxu0 0
    %1005 = vmatprep.subr.bf16.mxu0 0
    %1006 = vmatpush2.bf16.msra.mxu0 0
    %1007 = vmatprep.subr.bf16.mxu0 0
    %1008 = vmatpush2.bf16.msra.mxu0 0
    %1009 = vmatprep.subr.bf16.mxu0 0
    %1010 = vmatpush2.bf16.msra.mxu0 0
    %1011 = vmatprep.subr.bf16.mxu0 0
    %1012 = vmatpush2.bf16.msra.mxu0 0
    %1013 = vmatprep.subr.bf16.mxu0 0
    %1014 = vmatpush2.bf16.msra.mxu0 0
    %1015 = vmatprep.subr.bf16.mxu0 0
    %1016 = vmatpush2.bf16.msra.mxu0 0
    %1017 = vmatprep.mubr.bf16.mxu0 0
    %1018 = vmatmul.mubr.bf16.gmra.mxu0 %v913
    %v1019 = vpop.f32.mrf.mxu0
    %v1020 = vadd.f32 %v935, %v1019
    %v1021 = vpop.f32.mrf.mxu0
    %v1022 = vpop.f32.mrf.mxu0
    %v1023 = vpop.f32.mrf.mxu0
    %1024 = vdwg.mxu0
    %v1025 = vpack.c.bf16 %v1020, %v1020
    %1026 = vst [vmem:[#allocation11] sm:$0xf] %v1025
    // Predicated region
    $region58: #{tpu_custom_call.1} parent=1 // pred_check
      _
    $region59: #{tpu_custom_call.1} parent=1 // pred_check_branch
      %1028 = sbr.rel (0) target = $region61
    $region60: #{tpu_custom_call.1} parent=1 // pred_region
      %s1030 = ssub.s32 64, 64
      %1031 = vsyncadd [#allocation4], %s1030
      %s1033 = sshll.u32 [#allocation11], 4
      %s1034 = int_to_ptr.vmem [resolvable:$true] %s1033
      %1036 = dma.vmem_to_hbm [thread:$0]  %s1034, 64, %s9, [#allocation4]
    $region61: #{tpu_custom_call.1} parent=1 // pred_fallthru
      _
    // Predicated region
    $region62: #{tpu_custom_call.1} parent=1 // pred_check
      _
    $region63: #{tpu_custom_call.1} parent=1 // pred_check_branch
      %1038 = sbr.rel (0) target = $region65
    $region64: #{tpu_custom_call.1} parent=1 // pred_region
      %1039 = dma.done [#allocation4], 64
    $region65: #{tpu_custom_call.1} parent=1 // pred_fallthru
      _
    %1040 = vsyncpa [#allocation3], 1
    %1041 = vsyncpa [#allocation6], 1
    %1042 = vsyncpa [#allocation9], 1
    %1043 = vsyncpa [#allocation4], 1

</llo_original>
